<compile_context>
chip_gen: v7x
topology: tpu7x:2x2x1
jax: 0.10.0
libtpu: 0.0.40
codegen_flags: <defaults>
</compile_context>

<pallas_src>
import functools

import jax
import jax.numpy as jnp
from jax import lax
from jax.experimental import pallas as pl
from jax.experimental.pallas import tpu as pltpu


def gnn_layer_kernel(feat_ref, w_ref, w1_ref, b1_ref, w2_ref, b2_ref,
                     gamma_ref, beta_ref, out_ref, *, num_nodes, mxu_dtype):
    """One (batch, window) grid step.

    feat_ref : (1, T*N, D)  full per-batch feat, flattened (time, node) rows.
               Same block for every window of a batch -> fetched once per batch.
    out_ref  : (1, N, D)    LayerNorm(feat[:, i] + FFN(Y)) for window i = tw+2.
    """
    n = num_nodes
    tw = pl.program_id(1)                                   # window index, i = tw + 2

    # ---- window slice: time slices [tw, tw+1, tw+2] -> 3N rows ---------------
    start = pl.multiple_of(tw * n, n)
    win = feat_ref[0, pl.ds(start, 3 * n), :].astype(jnp.float32)     # (3N, D)
    feat_ctr = win[2 * n:, :]                                          # (N, D) == feat[:, i]

    # ---- wf = l2_normalize(feat * sigmoid(w), dim=-1), recomputed in-kernel --
    sig = jax.nn.sigmoid(w_ref[...].astype(jnp.float32))               # (1, D)
    wf = win * sig
    wf = wf * lax.rsqrt(jnp.maximum(
        jnp.sum(wf * wf, axis=-1, keepdims=True), 1e-24))   # == / max(||.||, 1e-12)
    wf_ctr = wf[2 * n:, :]                                              # (N, D)

    # ---- learned adjacency, banded: only the last-N rows of the 3N x 3N ------
    # window adjacency feed the output, so that is all we compute.
    adj = lax.dot_general(wf_ctr.astype(mxu_dtype), wf.astype(mxu_dtype),
                          (((1,), (1,)), ((), ())),
                          preferred_element_type=jnp.float32)           # (N, 3N)

    # Row (degree) normalization. Exact divide: the EUP approximate reciprocal
    # exceeded the numerical tolerance (amplified through FFN + LayerNorm).
    rowsum = jnp.sum(adj, axis=-1, keepdims=True) + 1e-12
    adj = adj / rowsum

    y = jnp.dot(adj.astype(mxu_dtype), win.astype(mxu_dtype),
                preferred_element_type=jnp.float32)                     # (N, D)

    # ---- FFN: Linear -> Dropout(0) -> ReLU -> Linear -------------------------
    h = jnp.dot(y.astype(mxu_dtype), w1_ref[...],
                preferred_element_type=jnp.float32) + b1_ref[...]
    h = jnp.maximum(h, 0.0)
    h = jnp.dot(h.astype(mxu_dtype), w2_ref[...],
                preferred_element_type=jnp.float32) + b2_ref[...]

    # ---- residual + LayerNorm (eps = 1e-5, affine) ----------------------------
    s = feat_ctr + h
    mean = jnp.mean(s, axis=-1, keepdims=True)
    var = jnp.mean((s - mean) ** 2, axis=-1, keepdims=True)
    s = (s - mean) * lax.rsqrt(var + 1e-5) * gamma_ref[...] + beta_ref[...]

    out_ref[0] = s.astype(out_ref.dtype)


def gnn_layer(feat, weights, w1, b1, w2, b2, gamma, beta, *, use_bf16=False):
    B, T, N, D = feat.shape
    To = T - 2
    TN = T * N
    mxu_dtype = jnp.bfloat16 if use_bf16 else jnp.float32

    feat_flat = feat.reshape(B, TN, D)                 # free: dims are contiguous
    row = lambda v: v.reshape(1, -1)

    kernel = functools.partial(gnn_layer_kernel, num_nodes=N, mxu_dtype=mxu_dtype)

    # Scoped-VMEM budget derived from the actual block sizes (double-buffered
    # feat/out blocks + resident params) plus headroom; capped at 48 MiB so it
    # stays within v7x's 64 MiB physical VMEM and is portable to v5e/v6e.
    itemsize = 2 if use_bf16 else 4
    block_bytes = (2 * TN * D * 4            # feat block, double-buffered
                   + 2 * N * D * 4           # out block, double-buffered
                   + 2 * 2 * D * D * itemsize  # FFN weights
                   + 12 * D * 4)             # bias / LN / sigmoid vectors
    vmem_limit = min(48 << 20, max(16 << 20, block_bytes + (4 << 20)))

    out = pl.pallas_call(
        kernel,
        out_shape=jax.ShapeDtypeStruct((B, To * N, D), feat.dtype),
        grid_spec=pltpu.PrefetchScalarGridSpec(
            num_scalar_prefetch=0,
            grid=(B, To),
            in_specs=[
                pl.BlockSpec((1, TN, D), lambda b, t: (b, 0, 0)),  # feat (flat, per batch)
                pl.BlockSpec((1, D), lambda b, t: (0, 0)),         # sigmoid weights
                pl.BlockSpec((D, D), lambda b, t: (0, 0)),         # ffn W1
                pl.BlockSpec((1, D), lambda b, t: (0, 0)),         # ffn b1
                pl.BlockSpec((D, D), lambda b, t: (0, 0)),         # ffn W2
                pl.BlockSpec((1, D), lambda b, t: (0, 0)),         # ffn b2
                pl.BlockSpec((1, D), lambda b, t: (0, 0)),         # ln gamma
                pl.BlockSpec((1, D), lambda b, t: (0, 0)),         # ln beta
            ],
            out_specs=pl.BlockSpec((1, N, D), lambda b, t: (b, t, 0)),
        ),
        compiler_params=pltpu.CompilerParams(
            dimension_semantics=("parallel", "parallel"),
            vmem_limit_bytes=int(vmem_limit)),
    )(feat_flat, row(weights),
      w1.astype(mxu_dtype), row(b1), w2.astype(mxu_dtype), row(b2),
      row(gamma), row(beta))

    return out.reshape(B, To, N, D)


def gnn_layer_ref(feat, weights, w1, b1, w2, b2, gamma, beta):
    """Pure-JAX reference mirroring the PyTorch forward."""
    B, T, N, D = feat.shape
    wf = feat * jax.nn.sigmoid(weights)
    wf = wf / jnp.maximum(
        jnp.sqrt(jnp.sum(wf * wf, axis=-1, keepdims=True)), 1e-12)
    outs = []
    for i in range(2, T):
        feature = feat[:, i - 2:i + 1].reshape(B, 3 * N, D)
        wfeat = wf[:, i - 2:i + 1].reshape(B, 3 * N, D)
        adj = wfeat @ jnp.swapaxes(wfeat, 1, 2)
        adj = adj / (jnp.sum(adj, axis=-1, keepdims=True) + 1e-12)
        y = (adj @ feature)[:, -N:, :]
        h = jnp.maximum(y @ w1 + b1, 0.0) @ w2 + b2
        s = feat[:, i] + h
        mean = jnp.mean(s, axis=-1, keepdims=True)
        var = jnp.mean((s - mean) ** 2, axis=-1, keepdims=True)
        outs.append((s - mean) / jnp.sqrt(var + 1e-5) * gamma + beta)
    return jnp.stack(outs, axis=1)


if __name__ == "__main__":
    B, T, N, D = 2, 6, 8, 128  # batch, time, num_nodes, hidden_dim

    key = jax.random.PRNGKey(0)
    k_feat, k_w, k_w1, k_b1, k_w2, k_b2 = jax.random.split(key, 6)

    feat = jax.random.normal(k_feat, (B, T, N, D), dtype=jnp.float32)
    weights = jax.random.uniform(k_w, (D,), dtype=jnp.float32)       # torch.rand
    w1 = jax.random.normal(k_w1, (D, D), dtype=jnp.float32) / jnp.sqrt(D)
    b1 = jax.random.normal(k_b1, (D,), dtype=jnp.float32) * 0.01
    w2 = jax.random.normal(k_w2, (D, D), dtype=jnp.float32) / jnp.sqrt(D)
    b2 = jax.random.normal(k_b2, (D,), dtype=jnp.float32) * 0.01
    gamma = jnp.ones((D,), dtype=jnp.float32)   # LayerNorm default affine
    beta = jnp.zeros((D,), dtype=jnp.float32)

    ref = gnn_layer_ref(feat, weights, w1, b1, w2, b2, gamma, beta)

    # Exact-precision config (f32 MXU operands, exact row normalization).
    out = gnn_layer(feat, weights, w1, b1, w2, b2, gamma, beta, use_bf16=False)
    out = jax.block_until_ready(out)
    assert out.shape == (B, T - 2, N, D), out.shape
    err_f32 = float(jnp.max(jnp.abs(out - ref)))
    assert jnp.allclose(out, ref, atol=2e-3, rtol=2e-3), err_f32

    # Perf config (bf16 MXU operands, f32 accumulation): checked at a
    # bf16-operand-rounding tolerance.
    out_bf16 = gnn_layer(feat, weights, w1, b1, w2, b2, gamma, beta,
                         use_bf16=True)
    out_bf16 = jax.block_until_ready(out_bf16)
    err_bf16 = float(jnp.max(jnp.abs(out_bf16 - ref)))
    assert jnp.allclose(out_bf16, ref, atol=5e-2, rtol=5e-2), err_bf16

    print("KERNEL_OK")
</pallas_src>

<mosaic_0001>
module attributes {stable_mosaic.version = 11 : i64} {
  func.func @gnn_layer_kernel(%arg0: i32, %arg1: i32, %arg2: memref<1x48x128xf32, #tpu.memory_space<vmem>>, %arg3: memref<1x128xf32, #tpu.memory_space<vmem>>, %arg4: memref<128x128xf32, #tpu.memory_space<vmem>>, %arg5: memref<1x128xf32, #tpu.memory_space<vmem>>, %arg6: memref<128x128xf32, #tpu.memory_space<vmem>>, %arg7: memref<1x128xf32, #tpu.memory_space<vmem>>, %arg8: memref<1x128xf32, #tpu.memory_space<vmem>>, %arg9: memref<1x128xf32, #tpu.memory_space<vmem>>, %arg10: memref<1x8x128xf32, #tpu.memory_space<vmem>>) attributes {dimension_semantics = [#tpu.dimension_semantics<parallel>, #tpu.dimension_semantics<parallel>], iteration_bounds = array<i64: 2, 4>, scalar_prefetch = 0 : i64, scratch_operands = 0 : i64, tpu.core_type = #tpu.core_type<tc>, window_params = [{transform_indices = @transform_0, window_bounds = array<i64: 1, 48, 128>}, {pipeline_mode = #tpu.pipeline_mode<synchronous>, transform_indices = @transform_1, window_bounds = array<i64: 1, 128>}, {pipeline_mode = #tpu.pipeline_mode<synchronous>, transform_indices = @transform_2, window_bounds = array<i64: 128, 128>}, {pipeline_mode = #tpu.pipeline_mode<synchronous>, transform_indices = @transform_3, window_bounds = array<i64: 1, 128>}, {pipeline_mode = #tpu.pipeline_mode<synchronous>, transform_indices = @transform_4, window_bounds = array<i64: 128, 128>}, {pipeline_mode = #tpu.pipeline_mode<synchronous>, transform_indices = @transform_5, window_bounds = array<i64: 1, 128>}, {pipeline_mode = #tpu.pipeline_mode<synchronous>, transform_indices = @transform_6, window_bounds = array<i64: 1, 128>}, {pipeline_mode = #tpu.pipeline_mode<synchronous>, transform_indices = @transform_7, window_bounds = array<i64: 1, 128>}, {transform_indices = @transform_8, window_bounds = array<i64: 1, 8, 128>}]} {
    %c8_i32 = arith.constant 8 : i32
    %0 = arith.muli %arg1, %c8_i32 : i32
    %1 = tpu.assume_multiple %0, 8 : i32
    %c0 = arith.constant 0 : index
    %2 = arith.index_cast %1 : i32 to index
    %c0_0 = arith.constant 0 : index
    %3 = vector.load %arg2[%c0, %2, %c0_0] : memref<1x48x128xf32, #tpu.memory_space<vmem>>, vector<1x24x128xf32>
    %4 = vector.shape_cast %3 : vector<1x24x128xf32> to vector<24x128xf32>
    %5 = vector.extract_strided_slice %4 {offsets = [16, 0], sizes = [8, 128], strides = [1, 1]} : vector<24x128xf32> to vector<8x128xf32>
    %c0_1 = arith.constant 0 : index
    %c0_2 = arith.constant 0 : index
    %6 = vector.load %arg3[%c0_1, %c0_2] : memref<1x128xf32, #tpu.memory_space<vmem>>, vector<1x128xf32>
    %7 = arith.negf %6 : vector<1x128xf32>
    %8 = math.exp %7 : vector<1x128xf32>
    %cst = arith.constant 1.000000e+00 : f32
    %9 = vector.broadcast %cst : f32 to vector<1x128xf32>
    %10 = arith.addf %9, %8 : vector<1x128xf32>
    %11 = arith.divf %9, %10 : vector<1x128xf32>
    %12 = vector.broadcast %11 : vector<1x128xf32> to vector<24x128xf32>
    %13 = arith.mulf %4, %12 : vector<24x128xf32>
    %14 = arith.mulf %13, %13 : vector<24x128xf32>
    %cst_3 = arith.constant dense<0.000000e+00> : vector<24xf32>
    %15 = vector.multi_reduction <add>, %14, %cst_3 [1] : vector<24x128xf32> to vector<24xf32>
    %16 = vector.shape_cast %15 : vector<24xf32> to vector<24x1xf32>
    %cst_4 = arith.constant 1.000000e-24 : f32
    %17 = vector.broadcast %cst_4 : f32 to vector<24x1xf32>
    %18 = arith.maximumf %16, %17 : vector<24x1xf32>
    %19 = math.rsqrt %18 : vector<24x1xf32>
    %20 = vector.broadcast %19 : vector<24x1xf32> to vector<24x128xf32>
    %21 = arith.mulf %13, %20 : vector<24x128xf32>
    %22 = vector.extract_strided_slice %21 {offsets = [16, 0], sizes = [8, 128], strides = [1, 1]} : vector<24x128xf32> to vector<8x128xf32>
    %cst_5 = arith.constant dense<0.000000e+00> : vector<8x24xf32>
    %23 = tpu.matmul %22, %21, %cst_5 {dimension_numbers = #tpu.dot_dimension_numbers<[1], [1], [0], [0], [0, 0, 1, 0], [], []>} : vector<8x128xf32>, vector<24x128xf32>, vector<8x24xf32> -> vector<8x24xf32>
    %cst_6 = arith.constant dense<0.000000e+00> : vector<8xf32>
    %24 = vector.multi_reduction <add>, %23, %cst_6 [1] : vector<8x24xf32> to vector<8xf32>
    %25 = vector.shape_cast %24 : vector<8xf32> to vector<8x1xf32>
    %cst_7 = arith.constant 9.99999996E-13 : f32
    %26 = vector.broadcast %cst_7 : f32 to vector<8x1xf32>
    %27 = arith.addf %25, %26 : vector<8x1xf32>
    %28 = vector.broadcast %27 : vector<8x1xf32> to vector<8x24xf32>
    %29 = arith.divf %23, %28 : vector<8x24xf32>
    %cst_8 = arith.constant dense<0.000000e+00> : vector<8x128xf32>
    %30 = tpu.matmul %29, %4, %cst_8 {dimension_numbers = #tpu.dot_dimension_numbers<[1], [0], [0], [1], [0, 0, 1, 1], [], []>} : vector<8x24xf32>, vector<24x128xf32>, vector<8x128xf32> -> vector<8x128xf32>
    %c0_9 = arith.constant 0 : index
    %c0_10 = arith.constant 0 : index
    %31 = vector.load %arg4[%c0_9, %c0_10] : memref<128x128xf32, #tpu.memory_space<vmem>>, vector<128x128xf32>
    %cst_11 = arith.constant dense<0.000000e+00> : vector<8x128xf32>
    %32 = tpu.matmul %30, %31, %cst_11 {dimension_numbers = #tpu.dot_dimension_numbers<[1], [0], [0], [1], [0, 0, 1, 1], [], []>} : vector<8x128xf32>, vector<128x128xf32>, vector<8x128xf32> -> vector<8x128xf32>
    %c0_12 = arith.constant 0 : index
    %c0_13 = arith.constant 0 : index
    %33 = vector.load %arg5[%c0_12, %c0_13] : memref<1x128xf32, #tpu.memory_space<vmem>>, vector<1x128xf32>
    %34 = vector.broadcast %33 : vector<1x128xf32> to vector<8x128xf32>
    %35 = arith.addf %32, %34 : vector<8x128xf32>
    %cst_14 = arith.constant 0.000000e+00 : f32
    %36 = vector.broadcast %cst_14 : f32 to vector<8x128xf32>
    %37 = arith.maximumf %35, %36 : vector<8x128xf32>
    %c0_15 = arith.constant 0 : index
    %c0_16 = arith.constant 0 : index
    %38 = vector.load %arg6[%c0_15, %c0_16] : memref<128x128xf32, #tpu.memory_space<vmem>>, vector<128x128xf32>
    %cst_17 = arith.constant dense<0.000000e+00> : vector<8x128xf32>
    %39 = tpu.matmul %37, %38, %cst_17 {dimension_numbers = #tpu.dot_dimension_numbers<[1], [0], [0], [1], [0, 0, 1, 1], [], []>} : vector<8x128xf32>, vector<128x128xf32>, vector<8x128xf32> -> vector<8x128xf32>
    %c0_18 = arith.constant 0 : index
    %c0_19 = arith.constant 0 : index
    %40 = vector.load %arg7[%c0_18, %c0_19] : memref<1x128xf32, #tpu.memory_space<vmem>>, vector<1x128xf32>
    %41 = vector.broadcast %40 : vector<1x128xf32> to vector<8x128xf32>
    %42 = arith.addf %39, %41 : vector<8x128xf32>
    %43 = arith.addf %5, %42 : vector<8x128xf32>
    %cst_20 = arith.constant dense<0.000000e+00> : vector<8xf32>
    %44 = vector.multi_reduction <add>, %43, %cst_20 [1] : vector<8x128xf32> to vector<8xf32>
    %45 = vector.shape_cast %44 : vector<8xf32> to vector<8x1xf32>
    %cst_21 = arith.constant 1.280000e+02 : f32
    %46 = vector.broadcast %cst_21 : f32 to vector<8x1xf32>
    %47 = arith.divf %45, %46 : vector<8x1xf32>
    %48 = vector.broadcast %47 : vector<8x1xf32> to vector<8x128xf32>
    %49 = arith.subf %43, %48 : vector<8x128xf32>
    %50 = arith.mulf %49, %49 : vector<8x128xf32>
    %cst_22 = arith.constant dense<0.000000e+00> : vector<8xf32>
    %51 = vector.multi_reduction <add>, %50, %cst_22 [1] : vector<8x128xf32> to vector<8xf32>
    %52 = vector.shape_cast %51 : vector<8xf32> to vector<8x1xf32>
    %cst_23 = arith.constant 1.280000e+02 : f32
    %53 = vector.broadcast %cst_23 : f32 to vector<8x1xf32>
    %54 = arith.divf %52, %53 : vector<8x1xf32>
    %55 = vector.broadcast %47 : vector<8x1xf32> to vector<8x128xf32>
    %56 = arith.subf %43, %55 : vector<8x128xf32>
    %cst_24 = arith.constant 9.99999974E-6 : f32
    %57 = vector.broadcast %cst_24 : f32 to vector<8x1xf32>
    %58 = arith.addf %54, %57 : vector<8x1xf32>
    %59 = math.rsqrt %58 : vector<8x1xf32>
    %60 = vector.broadcast %59 : vector<8x1xf32> to vector<8x128xf32>
    %61 = arith.mulf %56, %60 : vector<8x128xf32>
    %c0_25 = arith.constant 0 : index
    %c0_26 = arith.constant 0 : index
    %62 = vector.load %arg8[%c0_25, %c0_26] : memref<1x128xf32, #tpu.memory_space<vmem>>, vector<1x128xf32>
    %63 = vector.broadcast %62 : vector<1x128xf32> to vector<8x128xf32>
    %64 = arith.mulf %61, %63 : vector<8x128xf32>
    %c0_27 = arith.constant 0 : index
    %c0_28 = arith.constant 0 : index
    %65 = vector.load %arg9[%c0_27, %c0_28] : memref<1x128xf32, #tpu.memory_space<vmem>>, vector<1x128xf32>
    %66 = vector.broadcast %65 : vector<1x128xf32> to vector<8x128xf32>
    %67 = arith.addf %64, %66 : vector<8x128xf32>
    %c0_29 = arith.constant 0 : index
    %c0_30 = arith.constant 0 : index
    %c0_31 = arith.constant 0 : index
    %68 = vector.load %arg10[%c0_29, %c0_30, %c0_31] : memref<1x8x128xf32, #tpu.memory_space<vmem>>, vector<1x8x128xf32>
    %69 = vector.shape_cast %68 : vector<1x8x128xf32> to vector<8x128xf32>
    %70 = vector.shape_cast %67 : vector<8x128xf32> to vector<1x8x128xf32>
    tpu.vector_store %arg10[%c0_29, %c0_30, %c0_31], %70 {strides = array<i32>} : memref<1x8x128xf32, #tpu.memory_space<vmem>>, vector<1x8x128xf32>,
    return
  }
  func.func @transform_0(%arg0: i32, %arg1: i32) -> (i32, i32, i32) {
    %c0_i32 = arith.constant 0 : i32
    %c0_i32_0 = arith.constant 0 : i32
    %c0_i32_1 = arith.constant 0 : i32
    return %arg0, %c0_i32, %c0_i32_0 : i32, i32, i32
  }
  func.func @transform_1(%arg0: i32, %arg1: i32) -> (i32, i32) {
    %c0_i32 = arith.constant 0 : i32
    %c0_i32_0 = arith.constant 0 : i32
    %c0_i32_1 = arith.constant 0 : i32
    return %c0_i32, %c0_i32_0 : i32, i32
  }
  func.func @transform_2(%arg0: i32, %arg1: i32) -> (i32, i32) {
    %c0_i32 = arith.constant 0 : i32
    %c0_i32_0 = arith.constant 0 : i32
    %c0_i32_1 = arith.constant 0 : i32
    return %c0_i32, %c0_i32_0 : i32, i32
  }
  func.func @transform_3(%arg0: i32, %arg1: i32) -> (i32, i32) {
    %c0_i32 = arith.constant 0 : i32
    %c0_i32_0 = arith.constant 0 : i32
    %c0_i32_1 = arith.constant 0 : i32
    return %c0_i32, %c0_i32_0 : i32, i32
  }
  func.func @transform_4(%arg0: i32, %arg1: i32) -> (i32, i32) {
    %c0_i32 = arith.constant 0 : i32
    %c0_i32_0 = arith.constant 0 : i32
    %c0_i32_1 = arith.constant 0 : i32
    return %c0_i32, %c0_i32_0 : i32, i32
  }
  func.func @transform_5(%arg0: i32, %arg1: i32) -> (i32, i32) {
    %c0_i32 = arith.constant 0 : i32
    %c0_i32_0 = arith.constant 0 : i32
    %c0_i32_1 = arith.constant 0 : i32
    return %c0_i32, %c0_i32_0 : i32, i32
  }
  func.func @transform_6(%arg0: i32, %arg1: i32) -> (i32, i32) {
    %c0_i32 = arith.constant 0 : i32
    %c0_i32_0 = arith.constant 0 : i32
    %c0_i32_1 = arith.constant 0 : i32
    return %c0_i32, %c0_i32_0 : i32, i32
  }
  func.func @transform_7(%arg0: i32, %arg1: i32) -> (i32, i32) {
    %c0_i32 = arith.constant 0 : i32
    %c0_i32_0 = arith.constant 0 : i32
    %c0_i32_1 = arith.constant 0 : i32
    return %c0_i32, %c0_i32_0 : i32, i32
  }
  func.func @transform_8(%arg0: i32, %arg1: i32) -> (i32, i32, i32) {
    %c0_i32 = arith.constant 0 : i32
    %c0_i32_0 = arith.constant 0 : i32
    return %arg0, %arg1, %c0_i32 : i32, i32, i32
  }
}

</mosaic_0001>

<llo_original>
// kernel: tpu_custom_call.1
$region0: #{tpu_custom_call.1}
  #allocation0 [shape = 'u32[]', space=smem, size = 0x4, offset = 0x4, fixed_abs, tag = 'smem constant byte address 0x4 - core index']
  #allocation1 [shape = 'u32[144,128]{1,0:T(1,128)}', space=vmem, size = 0x12000, scoped, tag = 'internal scratch']
  %s0 = inlined_call_operand.hbm [shape: f32[2,48,128], index: 0, kind: input, shape index: {}]
  %s1 = inlined_call_operand.vmem [shape: f32[1,128], index: 1, kind: input, shape index: {}]
  %s2 = inlined_call_operand.hbm [shape: f32[128,128], index: 2, kind: input, shape index: {}]
  %s3 = inlined_call_operand.vmem [shape: f32[1,128], index: 3, kind: input, shape index: {}]
  %s4 = inlined_call_operand.hbm [shape: f32[128,128], index: 4, kind: input, shape index: {}]
  %s5 = inlined_call_operand.vmem [shape: f32[1,128], index: 5, kind: input, shape index: {}]
  %s6 = inlined_call_operand.vmem [shape: f32[1,128], index: 6, kind: input, shape index: {}]
  %s7 = inlined_call_operand.vmem [shape: f32[1,128], index: 7, kind: input, shape index: {}]
  %s8 = inlined_call_operand.hbm [shape: f32[2,32,128], index: 8, kind: output, shape index: {}]
  %s9 = sld [smem:[#allocation0]]
  $region77: #{tpu_custom_call.1} parent=0
    _
  %s11 = ssub.s32 1, %s9
  %s12 = scalar_select 0, %s11, %s9
  $region1: #{tpu_custom_call.1} parent=0
    #allocation2 [shape = 'u8[49152]{0}', space=vmem, size = 0xc000, scoped, tag = 'input window, operand 0']
    #allocation3 [shape = 's32[2]{0}', space=sflag, size = 0x8, scoped, tag = 'scoped memory for tpu_custom_call.1']
    #allocation4 [shape = 's32[2]{0}', space=sflag, size = 0x8, scoped, tag = 'scoped memory for tpu_custom_call.1']
    #allocation5 [shape = 'u8[65536]{0}', space=vmem, size = 0x10000, scoped, tag = 'input window, operand 2, single buffered']
    #allocation6 [shape = 's32[1]{0}', space=sflag, size = 0x4, scoped, tag = 'scoped memory for tpu_custom_call.1']
    #allocation7 [shape = 'u8[65536]{0}', space=vmem, size = 0x10000, scoped, tag = 'input window, operand 4, single buffered']
    #allocation8 [shape = 'u8[8192]{0}', space=vmem, size = 0x2000, scoped, tag = 'output window, operand 0']
    %13 = vsyncpa [#allocation3], 0
    %s14 = scalar_lea.sflag [#allocation3], 1
    %15 = vsyncpa %s14, 0
    %16 = vsyncpa [#allocation6], 0
    %17 = vsyncpa [#allocation4], 0
    %s18 = scalar_lea.sflag [#allocation4], 1
    %19 = vsyncpa %s18, 0
    loop: start=0, step=1, limit=10
    $region2: #{tpu_custom_call.1} parent=1 // loop_pre_header
      _
    $region3: #{tpu_custom_call.1} parent=1 // loop_header
      %s21 = sphi 0, %s25
      %p22 = scmp.ge.s32.totalorder %s21, 10
      %s28 = sphi 0, %s40
      %s29 = sphi 0, %s36
      %s30 = sphi 0, %s28
      %s31 = sphi 0, %s29
      %s32 = sphi 0, %s30
      %s33 = sphi 0, %s31
      %s43 = sphi 0, %s45
      %s46 = sphi 0, %s43
      %s47 = sphi 0, %s46
      %s63 = sphi 0, %s47
      %s67 = sphi 0, %s67
      %s69 = sphi 0, %s67
      %s70 = sphi 0, %s69
      %s84 = sphi 0, %s70
      %s88 = sphi 0, %s88
      %s90 = sphi 0, %s88
      %s91 = sphi 0, %s90
      %s105 = sphi 0, %s91
      %s109 = sphi 0, %s109
      %s111 = sphi 0, %s109
      %s112 = sphi 0, %s111
      %s126 = sphi 0, %s112
      %s130 = sphi 0, %s130
      %s132 = sphi 0, %s130
      %s133 = sphi 0, %s132
      %s147 = sphi 0, %s133
      %s151 = sphi 0, %s151
      %s153 = sphi 0, %s151
      %s154 = sphi 0, %s153
      %s168 = sphi 0, %s154
      %s172 = sphi 0, %s172
      %s174 = sphi 0, %s172
      %s175 = sphi 0, %s174
      %s189 = sphi 0, %s175
      %s193 = sphi 0, %s193
      %s195 = sphi 0, %s193
      %s196 = sphi 0, %s195
      %s210 = sphi 0, %s196
      %s218 = sphi 0, %s220
      %s221 = sphi 0, %s218
      %s222 = sphi 0, %s221
      %s238 = sphi 0, %s222
    $region4: #{tpu_custom_call.1} parent=1 // loop_header_branch
      %24 = sbr.rel (%p22) target = $region8
    $region5: #{tpu_custom_call.1} parent=1 // loop_body
      %s26 = ssub.s32 %s21, 1
      %s27 = ssub.s32 %s21, 2
      %s34 = sadd.s32 1, %s29
      %p35 = scmp.ge.s32.totalorder %s34, 4
      %s36 = scalar_select %p35, 0, %s34
      %s37 = sadd.s32 1, %s28
      %s38 = scalar_select %p35, %s37, %s28
      %p39 = scmp.ge.s32.totalorder %s38, 2
      %s40 = scalar_select %p39, 0, %s38
      %s41 = ssub.s32 %s28, %s40
      %p42 = scmp.eq.s32.totalorder %s41, 0
      %s44 = sadd.s32 %s43, 1
      %s45 = scalar_select %p42, %s43, %s44
      %p48 = pneg %p42
      %p49 = scmp.eq.s32.totalorder %s21, 7
      %p50 = por %p48, %p49
      %p51 = scmp.ne.s32.totalorder %s43, %s46
      %p52 = scmp.eq.s32.totalorder %s21, 0
      %p53 = por %p51, %p52
      %p54 = scmp.ne.s32.totalorder %s43, %s46
      %p55 = scmp.eq.s32.totalorder %s26, 7
      %p56 = por %p54, %p55
      %p57 = scmp.ne.s32.totalorder %s46, %s47
      %p58 = scmp.eq.s32.totalorder %s26, 0
      %p59 = por %p57, %p58
      %p60 = scmp.ne.s32.totalorder %s46, %s47
      %p61 = scmp.eq.s32.totalorder %s27, 7
      %p62 = por %p60, %p61
      %p64 = scmp.ne.s32.totalorder %s47, %s63
      %p65 = scmp.eq.s32.totalorder %s27, 0
      %p66 = por %p64, %p65
      %s68 = sadd.s32 %s67, 1
      %p71 = scmp.eq.s32.totalorder %s21, 7
      %p72 = scmp.ne.s32.totalorder %s67, %s69
      %p73 = scmp.eq.s32.totalorder %s21, 0
      %p74 = por %p72, %p73
      %p75 = scmp.ne.s32.totalorder %s67, %s69
      %p76 = scmp.eq.s32.totalorder %s26, 7
      %p77 = por %p75, %p76
      %p78 = scmp.ne.s32.totalorder %s69, %s70
      %p79 = scmp.eq.s32.totalorder %s26, 0
      %p80 = por %p78, %p79
      %p81 = scmp.ne.s32.totalorder %s69, %s70
      %p82 = scmp.eq.s32.totalorder %s27, 7
      %p83 = por %p81, %p82
      %p85 = scmp.ne.s32.totalorder %s70, %s84
      %p86 = scmp.eq.s32.totalorder %s27, 0
      %p87 = por %p85, %p86
      %s89 = sadd.s32 %s88, 1
      %p92 = scmp.eq.s32.totalorder %s21, 7
      %p93 = scmp.ne.s32.totalorder %s88, %s90
      %p94 = scmp.eq.s32.totalorder %s21, 0
      %p95 = por %p93, %p94
      %p96 = scmp.ne.s32.totalorder %s88, %s90
      %p97 = scmp.eq.s32.totalorder %s26, 7
      %p98 = por %p96, %p97
      %p99 = scmp.ne.s32.totalorder %s90, %s91
      %p100 = scmp.eq.s32.totalorder %s26, 0
      %p101 = por %p99, %p100
      %p102 = scmp.ne.s32.totalorder %s90, %s91
      %p103 = scmp.eq.s32.totalorder %s27, 7
      %p104 = por %p102, %p103
      %p106 = scmp.ne.s32.totalorder %s91, %s105
      %p107 = scmp.eq.s32.totalorder %s27, 0
      %p108 = por %p106, %p107
      %s110 = sadd.s32 %s109, 1
      %p113 = scmp.eq.s32.totalorder %s21, 7
      %p114 = scmp.ne.s32.totalorder %s109, %s111
      %p115 = scmp.eq.s32.totalorder %s21, 0
      %p116 = por %p114, %p115
      %p117 = scmp.ne.s32.totalorder %s109, %s111
      %p118 = scmp.eq.s32.totalorder %s26, 7
      %p119 = por %p117, %p118
      %p120 = scmp.ne.s32.totalorder %s111, %s112
      %p121 = scmp.eq.s32.totalorder %s26, 0
      %p122 = por %p120, %p121
      %p123 = scmp.ne.s32.totalorder %s111, %s112
      %p124 = scmp.eq.s32.totalorder %s27, 7
      %p125 = por %p123, %p124
      %p127 = scmp.ne.s32.totalorder %s112, %s126
      %p128 = scmp.eq.s32.totalorder %s27, 0
      %p129 = por %p127, %p128
      %s131 = sadd.s32 %s130, 1
      %p134 = scmp.eq.s32.totalorder %s21, 7
      %p135 = scmp.ne.s32.totalorder %s130, %s132
      %p136 = scmp.eq.s32.totalorder %s21, 0
      %p137 = por %p135, %p136
      %p138 = scmp.ne.s32.totalorder %s130, %s132
      %p139 = scmp.eq.s32.totalorder %s26, 7
      %p140 = por %p138, %p139
      %p141 = scmp.ne.s32.totalorder %s132, %s133
      %p142 = scmp.eq.s32.totalorder %s26, 0
      %p143 = por %p141, %p142
      %p144 = scmp.ne.s32.totalorder %s132, %s133
      %p145 = scmp.eq.s32.totalorder %s27, 7
      %p146 = por %p144, %p145
      %p148 = scmp.ne.s32.totalorder %s133, %s147
      %p149 = scmp.eq.s32.totalorder %s27, 0
      %p150 = por %p148, %p149
      %s152 = sadd.s32 %s151, 1
      %p155 = scmp.eq.s32.totalorder %s21, 7
      %p156 = scmp.ne.s32.totalorder %s151, %s153
      %p157 = scmp.eq.s32.totalorder %s21, 0
      %p158 = por %p156, %p157
      %p159 = scmp.ne.s32.totalorder %s151, %s153
      %p160 = scmp.eq.s32.totalorder %s26, 7
      %p161 = por %p159, %p160
      %p162 = scmp.ne.s32.totalorder %s153, %s154
      %p163 = scmp.eq.s32.totalorder %s26, 0
      %p164 = por %p162, %p163
      %p165 = scmp.ne.s32.totalorder %s153, %s154
      %p166 = scmp.eq.s32.totalorder %s27, 7
      %p167 = por %p165, %p166
      %p169 = scmp.ne.s32.totalorder %s154, %s168
      %p170 = scmp.eq.s32.totalorder %s27, 0
      %p171 = por %p169, %p170
      %s173 = sadd.s32 %s172, 1
      %p176 = scmp.eq.s32.totalorder %s21, 7
      %p177 = scmp.ne.s32.totalorder %s172, %s174
      %p178 = scmp.eq.s32.totalorder %s21, 0
      %p179 = por %p177, %p178
      %p180 = scmp.ne.s32.totalorder %s172, %s174
      %p181 = scmp.eq.s32.totalorder %s26, 7
      %p182 = por %p180, %p181
      %p183 = scmp.ne.s32.totalorder %s174, %s175
      %p184 = scmp.eq.s32.totalorder %s26, 0
      %p185 = por %p183, %p184
      %p186 = scmp.ne.s32.totalorder %s174, %s175
      %p187 = scmp.eq.s32.totalorder %s27, 7
      %p188 = por %p186, %p187
      %p190 = scmp.ne.s32.totalorder %s175, %s189
      %p191 = scmp.eq.s32.totalorder %s27, 0
      %p192 = por %p190, %p191
      %s194 = sadd.s32 %s193, 1
      %p197 = scmp.eq.s32.totalorder %s21, 7
      %p198 = scmp.ne.s32.totalorder %s193, %s195
      %p199 = scmp.eq.s32.totalorder %s21, 0
      %p200 = por %p198, %p199
      %p201 = scmp.ne.s32.totalorder %s193, %s195
      %p202 = scmp.eq.s32.totalorder %s26, 7
      %p203 = por %p201, %p202
      %p204 = scmp.ne.s32.totalorder %s195, %s196
      %p205 = scmp.eq.s32.totalorder %s26, 0
      %p206 = por %p204, %p205
      %p207 = scmp.ne.s32.totalorder %s195, %s196
      %p208 = scmp.eq.s32.totalorder %s27, 7
      %p209 = por %p207, %p208
      %p211 = scmp.ne.s32.totalorder %s196, %s210
      %p212 = scmp.eq.s32.totalorder %s27, 0
      %p213 = por %p211, %p212
      %s214 = ssub.s32 %s28, %s40
      %s215 = ssub.s32 %s29, %s36
      %s216 = sor.u32 %s214, %s215
      %p217 = scmp.eq.s32.totalorder %s216, 0
      %s219 = sadd.s32 %s218, 1
      %s220 = scalar_select %p217, %s218, %s219
      %p223 = pneg %p217
      %p224 = scmp.eq.s32.totalorder %s21, 7
      %p225 = por %p223, %p224
      %p226 = scmp.ne.s32.totalorder %s218, %s221
      %p227 = scmp.eq.s32.totalorder %s21, 0
      %p228 = por %p226, %p227
      %p229 = scmp.ne.s32.totalorder %s218, %s221
      %p230 = scmp.eq.s32.totalorder %s26, 7
      %p231 = por %p229, %p230
      %p232 = scmp.ne.s32.totalorder %s221, %s222
      %p233 = scmp.eq.s32.totalorder %s26, 0
      %p234 = por %p232, %p233
      %p235 = scmp.ne.s32.totalorder %s221, %s222
      %p236 = scmp.eq.s32.totalorder %s27, 7
      %p237 = por %p235, %p236
      %p239 = scmp.ne.s32.totalorder %s222, %s238
      %p240 = scmp.eq.s32.totalorder %s27, 0
      %p241 = por %p239, %p240
      %p242 = scmp.le.s32.totalorder 1, %s21
      %p243 = scmp.lt.s32.totalorder %s21, 9
      %p244 = pnand %p242, %p243
      %p245 = pneg %p244
      // Predicated region
      $region9: #{tpu_custom_call.1} parent=5 // pred_check
        _
      $region10: #{tpu_custom_call.1} parent=5 // pred_check_branch
        %247 = sbr.rel (%p244) target = $region12
      $region11: #{tpu_custom_call.1} parent=5 // pred_region
        %s248 = ssub.s32 %s21, 1
        // Predicated region
        $region13: #{tpu_custom_call.1} parent=11 // pred_check
          %p249 = pneg %p80
        $region14: #{tpu_custom_call.1} parent=11 // pred_check_branch
          %251 = sbr.rel (%p249) target = $region16
        $region15: #{tpu_custom_call.1} parent=11 // pred_region
          _
        $region16: #{tpu_custom_call.1} parent=11 // pred_fallthru
          _
        // Predicated region
        $region17: #{tpu_custom_call.1} parent=11 // pred_check
          %p252 = pneg %p101
        $region18: #{tpu_custom_call.1} parent=11 // pred_check_branch
          %254 = sbr.rel (%p252) target = $region20
        $region19: #{tpu_custom_call.1} parent=11 // pred_region
          %s256 = ssub.s32 2048, 2048
          %257 = vsyncadd [#allocation6], %s256
          %s258 = sshll.u32 [#allocation5], 4
          %s259 = int_to_ptr.vmem [resolvable:$true] %s258
          %264 = dma.hbm_to_vmem [thread:$0]  %s2, 2048, %s259, [#allocation6], 128, 128, 8
        $region20: #{tpu_custom_call.1} parent=11 // pred_fallthru
          _
        // Predicated region
        $region21: #{tpu_custom_call.1} parent=11 // pred_check
          %p265 = pneg %p122
        $region22: #{tpu_custom_call.1} parent=11 // pred_check_branch
          %267 = sbr.rel (%p265) target = $region24
        $region23: #{tpu_custom_call.1} parent=11 // pred_region
          _
        $region24: #{tpu_custom_call.1} parent=11 // pred_fallthru
          _
        // Predicated region
        $region25: #{tpu_custom_call.1} parent=11 // pred_check
          %p268 = pneg %p143
        $region26: #{tpu_custom_call.1} parent=11 // pred_check_branch
          %270 = sbr.rel (%p268) target = $region28
        $region27: #{tpu_custom_call.1} parent=11 // pred_region
          %s272 = ssub.s32 2048, 2048
          %273 = vsyncadd [#allocation6], %s272
          %s274 = sshll.u32 [#allocation7], 4
          %s275 = int_to_ptr.vmem [resolvable:$true] %s274
          %280 = dma.hbm_to_vmem [thread:$0]  %s4, 2048, %s275, [#allocation6], 128, 128, 8
        $region28: #{tpu_custom_call.1} parent=11 // pred_fallthru
          _
        // Predicated region
        $region29: #{tpu_custom_call.1} parent=11 // pred_check
          %p281 = pneg %p164
        $region30: #{tpu_custom_call.1} parent=11 // pred_check_branch
          %283 = sbr.rel (%p281) target = $region32
        $region31: #{tpu_custom_call.1} parent=11 // pred_region
          _
        $region32: #{tpu_custom_call.1} parent=11 // pred_fallthru
          _
        // Predicated region
        $region33: #{tpu_custom_call.1} parent=11 // pred_check
          %p284 = pneg %p185
        $region34: #{tpu_custom_call.1} parent=11 // pred_check_branch
          %286 = sbr.rel (%p284) target = $region36
        $region35: #{tpu_custom_call.1} parent=11 // pred_region
          _
        $region36: #{tpu_custom_call.1} parent=11 // pred_fallthru
          _
        // Predicated region
        $region37: #{tpu_custom_call.1} parent=11 // pred_check
          %p287 = pneg %p206
        $region38: #{tpu_custom_call.1} parent=11 // pred_check_branch
          %289 = sbr.rel (%p287) target = $region40
        $region39: #{tpu_custom_call.1} parent=11 // pred_region
          _
        $region40: #{tpu_custom_call.1} parent=11 // pred_fallthru
          _
      $region12: #{tpu_custom_call.1} parent=5 // pred_fallthru
        _
      %p290 = scmp.lt.s32.totalorder %s21, 8
      // Predicated region
      $region41: #{tpu_custom_call.1} parent=5 // pred_check
        %p291 = pneg %p290
      $region42: #{tpu_custom_call.1} parent=5 // pred_check_branch
        %293 = sbr.rel (%p291) target = $region44
      $region43: #{tpu_custom_call.1} parent=5 // pred_region
        // Predicated region
        $region45: #{tpu_custom_call.1} parent=43 // pred_check
          %p294 = pneg %p53
        $region46: #{tpu_custom_call.1} parent=43 // pred_check_branch
          %296 = sbr.rel (%p294) target = $region48
        $region47: #{tpu_custom_call.1} parent=43 // pred_region
          %s297 = sand.u32 %s43, 1
          %s298 = scalar_lea.sflag [#allocation3], %s297
          %s299 = sand.u32 %s43, 1
          %s300 = smul.addr %s299, 48
          %s301 = scalar_lea.vmem [#allocation2], %s300
          %s303 = ssub.s32 768, 768
          %304 = vsyncadd %s298, %s303
          %s305 = smul.addr %s28, 6
          %s306 = smul.addr %s305, 128
          %s307 = scalar_lea.hbm %s0, %s306
          %s308 = sshll.u32 %s301, 4
          %s309 = int_to_ptr.vmem [resolvable:$true] %s308
          %314 = dma.hbm_to_vmem [thread:$0]  %s307, 768, %s309, %s298, 128, 128, 8
        $region48: #{tpu_custom_call.1} parent=43 // pred_fallthru
          _
      $region44: #{tpu_custom_call.1} parent=5 // pred_fallthru
        _
      %p315 = scmp.le.s32.totalorder 1, %s21
      %p316 = scmp.lt.s32.totalorder %s21, 9
      %p317 = pnand %p315, %p316
      %p318 = pneg %p317
      // Predicated region
      $region49: #{tpu_custom_call.1} parent=5 // pred_check
        _
      $region50: #{tpu_custom_call.1} parent=5 // pred_check_branch
        %320 = sbr.rel (%p317) target = $region52
      $region51: #{tpu_custom_call.1} parent=5 // pred_region
        %s321 = ssub.s32 %s21, 1
        %s322 = sand.u32 %s46, 1
        %s323 = scalar_lea.sflag [#allocation3], %s322
        %s324 = sand.u32 %s46, 1
        %s325 = smul.addr %s324, 48
        %s326 = scalar_lea.vmem [#allocation2], %s325
        // Predicated region
        $region53: #{tpu_custom_call.1} parent=51 // pred_check
          %p327 = pneg %p59
        $region54: #{tpu_custom_call.1} parent=51 // pred_check_branch
          %329 = sbr.rel (%p327) target = $region56
        $region55: #{tpu_custom_call.1} parent=51 // pred_region
          %330 = dma.done %s323, 768
        $region56: #{tpu_custom_call.1} parent=51 // pred_fallthru
          _
        // Predicated region
        $region57: #{tpu_custom_call.1} parent=51 // pred_check
          %p331 = pneg %p101
        $region58: #{tpu_custom_call.1} parent=51 // pred_check_branch
          %333 = sbr.rel (%p331) target = $region60
        $region59: #{tpu_custom_call.1} parent=51 // pred_region
          %334 = dma.done [#allocation6], 2048
        $region60: #{tpu_custom_call.1} parent=51 // pred_fallthru
          _
        // Predicated region
        $region61: #{tpu_custom_call.1} parent=51 // pred_check
          %p335 = pneg %p143
        $region62: #{tpu_custom_call.1} parent=51 // pred_check_branch
          %337 = sbr.rel (%p335) target = $region64
        $region63: #{tpu_custom_call.1} parent=51 // pred_region
          %338 = dma.done [#allocation6], 2048
        $region64: #{tpu_custom_call.1} parent=51 // pred_fallthru
          _
        %s339 = sand.u32 %s46, 1
        %s340 = scalar_lea.sflag [#allocation3], %s339
        %s341 = sand.u32 %s46, 1
        %s342 = smul.addr %s341, 48
        %s343 = scalar_lea.vmem [#allocation2], %s342
        %p344 = pneg %p59
        %p345 = pneg %p56
        %p346 = pneg %p80
        %p347 = pneg %p77
        %p348 = pneg %p101
        %p349 = pneg %p98
        %p350 = pneg %p122
        %p351 = pneg %p119
        %p352 = pneg %p143
        %p353 = pneg %p140
        %p354 = pneg %p164
        %p355 = pneg %p161
        %p356 = pneg %p185
        %p357 = pneg %p182
        %p358 = pneg %p206
        %p359 = pneg %p203
        %p360 = pneg %p234
        %p361 = pneg %p231
        %s362 = sand.u32 %s221, 1
        %s363 = scalar_lea.sflag [#allocation4], %s362
        %s364 = sand.u32 %s221, 1
        %s365 = smul.addr %s364, 8
        %s366 = scalar_lea.vmem [#allocation8], %s365
        %s367 = smul.u32 %s31, 8
        %s368 = scalar_lea.vmem %s326, %s367 [#allocation2]
        %v369 = vld [vmem:[%s368] sm:$0xff]
        %v370 = vld [vmem:[%s368 + $0x8] sm:$0xff]
        %v371 = vld [vmem:[%s368 + $0x10] sm:$0xff]
        %v372 = vld [vmem:[%s1] sm:$0x1]
        %v373 = vxor.u32 %v372, 2147483648
        %v374 = vmul.f32 %v373, 1.442695
        %v375 = vpow.pop %v374
        %v376 = vadd.f32 %v375, 1.0
        %v377 = vrcp.pop %v376
        %v378 = vmul.f32 1.0, %v377
        %v380 = vlaneseq
        %v381 = vshrl.u32 %v380, 7
        %v382 = vsub.s32 0, %v381
        %v383 = vrot.slane %v378, %v382
        %v385 = vmul.f32 %v369, %v383
        %v386 = vmul.f32 %v370, %v383
        %v387 = vmul.f32 %v371, %v383
        %v388 = vmul.f32 %v385, %v385
        %v389 = vmul.f32 %v386, %v386
        %v390 = vmul.f32 %v387, %v387
        %391 = vadd.xlane.f32.xlu0 %v388
        %v392 = vpop.xlane.xlu0 %391
        %393 = vadd.xlane.f32.xlu0 %v389
        %v394 = vpop.xlane.xlu0 %393
        %395 = vadd.xlane.f32.xlu0 %v390
        %v396 = vpop.xlane.xlu0 %395
        %v397 = vmax.f32 %v392, 1e-24
        %v398 = vmax.f32 %v394, 1e-24
        %v399 = vmax.f32 %v396, 1e-24
        %v400 = vrsqrt.pop %v397
        %v401 = vrsqrt.pop %v398
        %v402 = vrsqrt.pop %v399
        %v403 = vmul.f32 %v385, %v400
        %v404 = vmul.f32 %v386, %v401
        %v405 = vmul.f32 %v387, %v402
        %406 = vmatprep.subr.mxu0 0.0
        %407 = vmatpush1.xpose.msra.mxu0 %v403
        %408 = vmatprep.subr.mxu0 0.0
        %409 = vmatpush1.xpose.msra.mxu0 %v404
        %410 = vmatprep.subr.mxu0 0.0
        %411 = vmatpush1.xpose.msra.mxu0 %v405
        %412 = vmatprep.subr.mxu0 0.0
        %413 = vmatpush1.xpose.msra.mxu0 0.0
        %414 = vmatprep.subr.mxu0 0.0
        %415 = vmatpush1.xpose.msra.mxu0 0.0
        %416 = vmatprep.subr.mxu0 0.0
        %417 = vmatpush1.xpose.msra.mxu0 0.0
        %418 = vmatprep.subr.mxu0 0.0
        %419 = vmatpush1.xpose.msra.mxu0 0.0
        %420 = vmatprep.subr.mxu0 0.0
        %421 = vmatpush1.xpose.msra.mxu0 0.0
        %422 = vmatprep.subr.mxu0 0.0
        %423 = vmatpush1.xpose.msra.mxu0 0.0
        %424 = vmatprep.subr.mxu0 0.0
        %425 = vmatpush1.xpose.msra.mxu0 0.0
        %426 = vmatprep.subr.mxu0 0.0
        %427 = vmatpush1.xpose.msra.mxu0 0.0
        %428 = vmatprep.subr.mxu0 0.0
        %429 = vmatpush1.xpose.msra.mxu0 0.0
        %430 = vmatprep.subr.mxu0 0.0
        %431 = vmatpush1.xpose.msra.mxu0 0.0
        %432 = vmatprep.subr.mxu0 0.0
        %433 = vmatpush1.xpose.msra.mxu0 0.0
        %434 = vmatprep.subr.mxu0 0.0
        %435 = vmatpush1.xpose.msra.mxu0 0.0
        %436 = vmatprep.subr.mxu0 0.0
        %437 = vmatpush1.xpose.msra.mxu0 0.0
        %438 = vmatprep.subr.mxu0 0.0
        %439 = vmatpush1.xpose.msra.mxu0 0.0
        %440 = vmatprep.subr.mxu0 0.0
        %441 = vmatpush1.xpose.msra.mxu0 0.0
        %442 = vmatprep.subr.mxu0 0.0
        %443 = vmatpush1.xpose.msra.mxu0 0.0
        %444 = vmatprep.subr.mxu0 0.0
        %445 = vmatpush1.xpose.msra.mxu0 0.0
        %446 = vmatprep.subr.mxu0 0.0
        %447 = vmatpush1.xpose.msra.mxu0 0.0
        %448 = vmatprep.subr.mxu0 0.0
        %449 = vmatpush1.xpose.msra.mxu0 0.0
        %450 = vmatprep.subr.mxu0 0.0
        %451 = vmatpush1.xpose.msra.mxu0 0.0
        %452 = vmatprep.subr.mxu0 0.0
        %453 = vmatpush1.xpose.msra.mxu0 0.0
        %454 = vmatprep.subr.mxu0 0.0
        %455 = vmatpush1.xpose.msra.mxu0 0.0
        %456 = vmatprep.subr.mxu0 0.0
        %457 = vmatpush1.xpose.msra.mxu0 0.0
        %458 = vmatprep.subr.mxu0 0.0
        %459 = vmatpush1.xpose.msra.mxu0 0.0
        %460 = vmatprep.subr.mxu0 0.0
        %461 = vmatpush1.xpose.msra.mxu0 0.0
        %462 = vmatprep.subr.mxu0 0.0
        %463 = vmatpush1.xpose.msra.mxu0 0.0
        %464 = vmatprep.subr.mxu0 0.0
        %465 = vmatpush1.xpose.msra.mxu0 0.0
        %466 = vmatprep.subr.mxu0 0.0
        %467 = vmatpush1.xpose.msra.mxu0 0.0
        %468 = vmatprep.subr.mxu0 0.0
        %469 = vmatpush1.xpose.msra.mxu0 0.0
        %470 = vmatprep.mubr.f32.mxu0 0.0
        %471 = vmatmul.mubr.f32.gmra.mrb[0].mxu0 %v405
        %v472 = vpop.f32.mrb[0].mxu0
        %v473 = vadd.f32 0.0, %v472
        %v474 = vpop.f32.mrb[0].mxu0
        %475 = vdwg.mxu0
        %vm476 = vcmask 195584
        %v477 = vsel %vm476, %v473, 0.0
        %478 = vadd.xlane.f32.xlu0 %v477
        %v479 = vpop.xlane.xlu0 %478
        %v480 = vadd.f32 %v479, 1e-12
        %v481 = vrcp.pop %v480
        %v482 = vmul.f32 %v473, %v481
        %v484 = vsel %vm476, %v482, 0
        %486 = vmatprep.subr.mxu0 0.0
        %487 = vmatpush1.msra.mxu0 %v369
        %488 = vmatprep.subr.mxu0 0.0
        %489 = vmatpush1.msra.mxu0 %v370
        %490 = vmatprep.subr.mxu0 0.0
        %491 = vmatpush1.msra.mxu0 %v371
        %492 = vmatprep.subr.mxu0 0.0
        %493 = vmatpush1.msra.mxu0 0.0
        %494 = vmatprep.subr.mxu0 0.0
        %495 = vmatpush1.msra.mxu0 0.0
        %496 = vmatprep.subr.mxu0 0.0
        %497 = vmatpush1.msra.mxu0 0.0
        %498 = vmatprep.subr.mxu0 0.0
        %499 = vmatpush1.msra.mxu0 0.0
        %500 = vmatprep.subr.mxu0 0.0
        %501 = vmatpush1.msra.mxu0 0.0
        %502 = vmatprep.subr.mxu0 0.0
        %503 = vmatpush1.msra.mxu0 0.0
        %504 = vmatprep.subr.mxu0 0.0
        %505 = vmatpush1.msra.mxu0 0.0
        %506 = vmatprep.subr.mxu0 0.0
        %507 = vmatpush1.msra.mxu0 0.0
        %508 = vmatprep.subr.mxu0 0.0
        %509 = vmatpush1.msra.mxu0 0.0
        %510 = vmatprep.subr.mxu0 0.0
        %511 = vmatpush1.msra.mxu0 0.0
        %512 = vmatprep.subr.mxu0 0.0
        %513 = vmatpush1.msra.mxu0 0.0
        %514 = vmatprep.subr.mxu0 0.0
        %515 = vmatpush1.msra.mxu0 0.0
        %516 = vmatprep.subr.mxu0 0.0
        %517 = vmatpush1.msra.mxu0 0.0
        %518 = vmatprep.subr.mxu0 0.0
        %519 = vmatpush1.msra.mxu0 0.0
        %520 = vmatprep.subr.mxu0 0.0
        %521 = vmatpush1.msra.mxu0 0.0
        %522 = vmatprep.subr.mxu0 0.0
        %523 = vmatpush1.msra.mxu0 0.0
        %524 = vmatprep.subr.mxu0 0.0
        %525 = vmatpush1.msra.mxu0 0.0
        %526 = vmatprep.subr.mxu0 0.0
        %527 = vmatpush1.msra.mxu0 0.0
        %528 = vmatprep.subr.mxu0 0.0
        %529 = vmatpush1.msra.mxu0 0.0
        %530 = vmatprep.subr.mxu0 0.0
        %531 = vmatpush1.msra.mxu0 0.0
        %532 = vmatprep.subr.mxu0 0.0
        %533 = vmatpush1.msra.mxu0 0.0
        %534 = vmatprep.subr.mxu0 0.0
        %535 = vmatpush1.msra.mxu0 0.0
        %536 = vmatprep.subr.mxu0 0.0
        %537 = vmatpush1.msra.mxu0 0.0
        %538 = vmatprep.subr.mxu0 0.0
        %539 = vmatpush1.msra.mxu0 0.0
        %540 = vmatprep.subr.mxu0 0.0
        %541 = vmatpush1.msra.mxu0 0.0
        %542 = vmatprep.subr.mxu0 0.0
        %543 = vmatpush1.msra.mxu0 0.0
        %544 = vmatprep.subr.mxu0 0.0
        %545 = vmatpush1.msra.mxu0 0.0
        %546 = vmatprep.subr.mxu0 0.0
        %547 = vmatpush1.msra.mxu0 0.0
        %548 = vmatprep.subr.mxu0 0.0
        %549 = vmatpush1.msra.mxu0 0.0
        %550 = vmatprep.mubr.f32.mxu0 0.0
        %551 = vmatmul.mubr.f32.gmra.mrb[0].mxu0 %v484
        %v552 = vpop.f32.mrb[0].mxu0
        %v553 = vadd.f32 0.0, %v552
        %v554 = vpop.f32.mrb[0].mxu0
        %555 = vdwg.mxu0
        %v556 = vld [vmem:[#allocation5] sm:$0xff]
        %v557 = vld [vmem:[#allocation5 + $0x8] sm:$0xff]
        %v558 = vld [vmem:[#allocation5 + $0x10] sm:$0xff]
        %v559 = vld [vmem:[#allocation5 + $0x18] sm:$0xff]
        %v560 = vld [vmem:[#allocation5 + $0x20] sm:$0xff]
        %v561 = vld [vmem:[#allocation5 + $0x28] sm:$0xff]
        %v562 = vld [vmem:[#allocation5 + $0x30] sm:$0xff]
        %v563 = vld [vmem:[#allocation5 + $0x38] sm:$0xff]
        %v564 = vld [vmem:[#allocation5 + $0x40] sm:$0xff]
        %v565 = vld [vmem:[#allocation5 + $0x48] sm:$0xff]
        %v566 = vld [vmem:[#allocation5 + $0x50] sm:$0xff]
        %v567 = vld [vmem:[#allocation5 + $0x58] sm:$0xff]
        %v568 = vld [vmem:[#allocation5 + $0x60] sm:$0xff]
        %v569 = vld [vmem:[#allocation5 + $0x68] sm:$0xff]
        %v570 = vld [vmem:[#allocation5 + $0x70] sm:$0xff]
        %v571 = vld [vmem:[#allocation5 + $0x78] sm:$0xff]
        %v572 = vld [vmem:[%s3] sm:$0x1]
        %v574 = vlaneseq
        %v575 = vshrl.u32 %v574, 7
        %v576 = vsub.s32 0, %v575
        %v577 = vrot.slane %v572, %v576
        %579 = vmatprep.subr.mxu0 0.0
        %580 = vmatpush1.msra.mxu0 %v556
        %581 = vmatprep.subr.mxu0 0.0
        %582 = vmatpush1.msra.mxu0 %v557
        %583 = vmatprep.subr.mxu0 0.0
        %584 = vmatpush1.msra.mxu0 %v558
        %585 = vmatprep.subr.mxu0 0.0
        %586 = vmatpush1.msra.mxu0 %v559
        %587 = vmatprep.subr.mxu0 0.0
        %588 = vmatpush1.msra.mxu0 %v560
        %589 = vmatprep.subr.mxu0 0.0
        %590 = vmatpush1.msra.mxu0 %v561
        %591 = vmatprep.subr.mxu0 0.0
        %592 = vmatpush1.msra.mxu0 %v562
        %593 = vmatprep.subr.mxu0 0.0
        %594 = vmatpush1.msra.mxu0 %v563
        %595 = vmatprep.subr.mxu0 0.0
        %596 = vmatpush1.msra.mxu0 %v564
        %597 = vmatprep.subr.mxu0 0.0
        %598 = vmatpush1.msra.mxu0 %v565
        %599 = vmatprep.subr.mxu0 0.0
        %600 = vmatpush1.msra.mxu0 %v566
        %601 = vmatprep.subr.mxu0 0.0
        %602 = vmatpush1.msra.mxu0 %v567
        %603 = vmatprep.subr.mxu0 0.0
        %604 = vmatpush1.msra.mxu0 %v568
        %605 = vmatprep.subr.mxu0 0.0
        %606 = vmatpush1.msra.mxu0 %v569
        %607 = vmatprep.subr.mxu0 0.0
        %608 = vmatpush1.msra.mxu0 %v570
        %609 = vmatprep.subr.mxu0 0.0
        %610 = vmatpush1.msra.mxu0 %v571
        %611 = vmatprep.subr.mxu0 0.0
        %612 = vmatpush1.msra.mxu0 0.0
        %613 = vmatprep.subr.mxu0 0.0
        %614 = vmatpush1.msra.mxu0 0.0
        %615 = vmatprep.subr.mxu0 0.0
        %616 = vmatpush1.msra.mxu0 0.0
        %617 = vmatprep.subr.mxu0 0.0
        %618 = vmatpush1.msra.mxu0 0.0
        %619 = vmatprep.subr.mxu0 0.0
        %620 = vmatpush1.msra.mxu0 0.0
        %621 = vmatprep.subr.mxu0 0.0
        %622 = vmatpush1.msra.mxu0 0.0
        %623 = vmatprep.subr.mxu0 0.0
        %624 = vmatpush1.msra.mxu0 0.0
        %625 = vmatprep.subr.mxu0 0.0
        %626 = vmatpush1.msra.mxu0 0.0
        %627 = vmatprep.subr.mxu0 0.0
        %628 = vmatpush1.msra.mxu0 0.0
        %629 = vmatprep.subr.mxu0 0.0
        %630 = vmatpush1.msra.mxu0 0.0
        %631 = vmatprep.subr.mxu0 0.0
        %632 = vmatpush1.msra.mxu0 0.0
        %633 = vmatprep.subr.mxu0 0.0
        %634 = vmatpush1.msra.mxu0 0.0
        %635 = vmatprep.subr.mxu0 0.0
        %636 = vmatpush1.msra.mxu0 0.0
        %637 = vmatprep.subr.mxu0 0.0
        %638 = vmatpush1.msra.mxu0 0.0
        %639 = vmatprep.subr.mxu0 0.0
        %640 = vmatpush1.msra.mxu0 0.0
        %641 = vmatprep.subr.mxu0 0.0
        %642 = vmatpush1.msra.mxu0 0.0
        %643 = vmatprep.mubr.f32.mxu0 0.0
        %644 = vmatmul.mubr.f32.gmra.mrb[0].mxu0 %v553
        %v645 = vpop.f32.mrb[0].mxu0
        %v646 = vadd.f32 %v577, %v645
        %v647 = vpop.f32.mrb[0].mxu0
        %648 = vdwg.mxu0
        %v649 = vmax.f32 %v646, 0.0
        %v650 = vld [vmem:[#allocation7] sm:$0xff]
        %v651 = vld [vmem:[#allocation7 + $0x8] sm:$0xff]
        %v652 = vld [vmem:[#allocation7 + $0x10] sm:$0xff]
        %v653 = vld [vmem:[#allocation7 + $0x18] sm:$0xff]
        %v654 = vld [vmem:[#allocation7 + $0x20] sm:$0xff]
        %v655 = vld [vmem:[#allocation7 + $0x28] sm:$0xff]
        %v656 = vld [vmem:[#allocation7 + $0x30] sm:$0xff]
        %v657 = vld [vmem:[#allocation7 + $0x38] sm:$0xff]
        %v658 = vld [vmem:[#allocation7 + $0x40] sm:$0xff]
        %v659 = vld [vmem:[#allocation7 + $0x48] sm:$0xff]
        %v660 = vld [vmem:[#allocation7 + $0x50] sm:$0xff]
        %v661 = vld [vmem:[#allocation7 + $0x58] sm:$0xff]
        %v662 = vld [vmem:[#allocation7 + $0x60] sm:$0xff]
        %v663 = vld [vmem:[#allocation7 + $0x68] sm:$0xff]
        %v664 = vld [vmem:[#allocation7 + $0x70] sm:$0xff]
        %v665 = vld [vmem:[#allocation7 + $0x78] sm:$0xff]
        %v666 = vld [vmem:[%s5] sm:$0x1]
        %v668 = vlaneseq
        %v669 = vshrl.u32 %v668, 7
        %v670 = vsub.s32 0, %v669
        %v671 = vrot.slane %v666, %v670
        %673 = vmatprep.subr.mxu0 0.0
        %674 = vmatpush1.msra.mxu0 %v650
        %675 = vmatprep.subr.mxu0 0.0
        %676 = vmatpush1.msra.mxu0 %v651
        %677 = vmatprep.subr.mxu0 0.0
        %678 = vmatpush1.msra.mxu0 %v652
        %679 = vmatprep.subr.mxu0 0.0
        %680 = vmatpush1.msra.mxu0 %v653
        %681 = vmatprep.subr.mxu0 0.0
        %682 = vmatpush1.msra.mxu0 %v654
        %683 = vmatprep.subr.mxu0 0.0
        %684 = vmatpush1.msra.mxu0 %v655
        %685 = vmatprep.subr.mxu0 0.0
        %686 = vmatpush1.msra.mxu0 %v656
        %687 = vmatprep.subr.mxu0 0.0
        %688 = vmatpush1.msra.mxu0 %v657
        %689 = vmatprep.subr.mxu0 0.0
        %690 = vmatpush1.msra.mxu0 %v658
        %691 = vmatprep.subr.mxu0 0.0
        %692 = vmatpush1.msra.mxu0 %v659
        %693 = vmatprep.subr.mxu0 0.0
        %694 = vmatpush1.msra.mxu0 %v660
        %695 = vmatprep.subr.mxu0 0.0
        %696 = vmatpush1.msra.mxu0 %v661
        %697 = vmatprep.subr.mxu0 0.0
        %698 = vmatpush1.msra.mxu0 %v662
        %699 = vmatprep.subr.mxu0 0.0
        %700 = vmatpush1.msra.mxu0 %v663
        %701 = vmatprep.subr.mxu0 0.0
        %702 = vmatpush1.msra.mxu0 %v664
        %703 = vmatprep.subr.mxu0 0.0
        %704 = vmatpush1.msra.mxu0 %v665
        %705 = vmatprep.subr.mxu0 0.0
        %706 = vmatpush1.msra.mxu0 0.0
        %707 = vmatprep.subr.mxu0 0.0
        %708 = vmatpush1.msra.mxu0 0.0
        %709 = vmatprep.subr.mxu0 0.0
        %710 = vmatpush1.msra.mxu0 0.0
        %711 = vmatprep.subr.mxu0 0.0
        %712 = vmatpush1.msra.mxu0 0.0
        %713 = vmatprep.subr.mxu0 0.0
        %714 = vmatpush1.msra.mxu0 0.0
        %715 = vmatprep.subr.mxu0 0.0
        %716 = vmatpush1.msra.mxu0 0.0
        %717 = vmatprep.subr.mxu0 0.0
        %718 = vmatpush1.msra.mxu0 0.0
        %719 = vmatprep.subr.mxu0 0.0
        %720 = vmatpush1.msra.mxu0 0.0
        %721 = vmatprep.subr.mxu0 0.0
        %722 = vmatpush1.msra.mxu0 0.0
        %723 = vmatprep.subr.mxu0 0.0
        %724 = vmatpush1.msra.mxu0 0.0
        %725 = vmatprep.subr.mxu0 0.0
        %726 = vmatpush1.msra.mxu0 0.0
        %727 = vmatprep.subr.mxu0 0.0
        %728 = vmatpush1.msra.mxu0 0.0
        %729 = vmatprep.subr.mxu0 0.0
        %730 = vmatpush1.msra.mxu0 0.0
        %731 = vmatprep.subr.mxu0 0.0
        %732 = vmatpush1.msra.mxu0 0.0
        %733 = vmatprep.subr.mxu0 0.0
        %734 = vmatpush1.msra.mxu0 0.0
        %735 = vmatprep.subr.mxu0 0.0
        %736 = vmatpush1.msra.mxu0 0.0
        %737 = vmatprep.mubr.f32.mxu0 0.0
        %738 = vmatmul.mubr.f32.gmra.mrb[0].mxu0 %v649
        %v739 = vpop.f32.mrb[0].mxu0
        %v740 = vadd.f32 %v671, %v739
        %v741 = vpop.f32.mrb[0].mxu0
        %742 = vdwg.mxu0
        %v743 = vadd.f32 %v371, %v740
        %744 = vadd.xlane.f32.xlu0 %v743
        %v745 = vpop.xlane.xlu0 %744
        %v746 = vrcp.pop 128.0
        %v747 = vmul.f32 %v745, %v746
        %v748 = vsub.f32 %v743, %v747
        %v749 = vmul.f32 %v748, %v748
        %750 = vadd.xlane.f32.xlu0 %v749
        %v751 = vpop.xlane.xlu0 %750
        %v752 = vmul.f32 %v751, %v746
        %v753 = vadd.f32 %v752, 1e-05
        %v754 = vrsqrt.pop %v753
        %v755 = vmul.f32 %v748, %v754
        %v756 = vld [vmem:[%s6] sm:$0x1]
        %v758 = vlaneseq
        %v759 = vshrl.u32 %v758, 7
        %v760 = vsub.s32 0, %v759
        %v761 = vrot.slane %v756, %v760
        %v763 = vmul.f32 %v755, %v761
        %v764 = vld [vmem:[%s7] sm:$0x1]
        %v766 = vlaneseq
        %v767 = vshrl.u32 %v766, 7
        %v768 = vsub.s32 0, %v767
        %v769 = vrot.slane %v764, %v768
        %v771 = vadd.f32 %v763, %v769
        %772 = vst [vmem:[%s366] sm:$0xff] %v771
        %s773 = sand.u32 %s221, 1
        %s774 = scalar_lea.sflag [#allocation4], %s773
        %s775 = sand.u32 %s221, 1
        %s776 = smul.addr %s775, 8
        %s777 = scalar_lea.vmem [#allocation8], %s776
        // Predicated region
        $region65: #{tpu_custom_call.1} parent=51 // pred_check
          %p778 = pneg %p231
        $region66: #{tpu_custom_call.1} parent=51 // pred_check_branch
          %780 = sbr.rel (%p778) target = $region68
        $region67: #{tpu_custom_call.1} parent=51 // pred_region
          %s782 = ssub.s32 128, 128
          %783 = vsyncadd %s774, %s782
          %s784 = smul.addr %s30, 4
          %s785 = sadd.s32 %s31, %s784
          %s786 = smul.addr %s785, 128
          %s787 = scalar_lea.hbm %s8, %s786
          %s789 = sshll.u32 %s777, 4
          %s790 = int_to_ptr.vmem [resolvable:$true] %s789
          %792 = dma.vmem_to_hbm [thread:$0]  %s790, 128, %s787, %s774
        $region68: #{tpu_custom_call.1} parent=51 // pred_fallthru
          _
      $region52: #{tpu_custom_call.1} parent=5 // pred_fallthru
        _
      %p793 = scmp.le.s32.totalorder 2, %s21
      // Predicated region
      $region69: #{tpu_custom_call.1} parent=5 // pred_check
        %p794 = pneg %p793
      $region70: #{tpu_custom_call.1} parent=5 // pred_check_branch
        %796 = sbr.rel (%p794) target = $region72
      $region71: #{tpu_custom_call.1} parent=5 // pred_region
        %s797 = ssub.s32 %s21, 2
        // Predicated region
        $region73: #{tpu_custom_call.1} parent=71 // pred_check
          %p798 = pneg %p237
        $region74: #{tpu_custom_call.1} parent=71 // pred_check_branch
          %800 = sbr.rel (%p798) target = $region76
        $region75: #{tpu_custom_call.1} parent=71 // pred_region
          %s801 = sand.u32 %s222, 1
          %s802 = scalar_lea.sflag [#allocation4], %s801
          %s803 = sand.u32 %s222, 1
          %s804 = smul.addr %s803, 8
          %s805 = scalar_lea.vmem [#allocation8], %s804
          %806 = dma.done %s802, 128
        $region76: #{tpu_custom_call.1} parent=71 // pred_fallthru
          _
      $region72: #{tpu_custom_call.1} parent=5 // pred_fallthru
        _
    $region6: #{tpu_custom_call.1} parent=1 // loop_footer
      %s25 = sadd.s32 1, %s21
    $region7: #{tpu_custom_call.1} parent=1 // loop_footer_branch
      %20 = sbr.rel target = $region3
    $region8: #{tpu_custom_call.1} parent=1 // loop_exit
      _
    %807 = vsyncpa [#allocation3], 1
    %s808 = scalar_lea.sflag [#allocation3], 1
    %809 = vsyncpa %s808, 1
    %810 = vsyncpa [#allocation6], 1
    %811 = vsyncpa [#allocation4], 1
    %s812 = scalar_lea.sflag [#allocation4], 1
    %813 = vsyncpa %s812, 1

</llo_original>
